<compile_context>
chip_gen: v5e
topology: v5e:2x2
jax: 0.10.0
libtpu: 0.0.40
codegen_flags: <defaults>
</compile_context>

<pallas_src>
import jax
import jax.numpy as jnp
import numpy as np
from jax import lax
from jax.experimental import pallas as pl
from jax.experimental.pallas import tpu as pltpu


def ce_kernel(pred_ref, idx_ref, out_ref):
    """One (batch-block, row-block) tile -> one scalar partial sum."""
    idx = idx_ref[...]                                    # (BB, TR, 1) int32
    pred = pred_ref[...]                                  # (BB, TR, N2) native dtype
    n2 = pred.shape[-1]

    # One-hot of the gt index from a lane iota; gather-before-log.  The select
    # and lane-sum stay in the native dtype (exact: one nonzero element per
    # row), the f32 cast happens on the (BB, TR, 1) result just before the log.
    col = lax.broadcasted_iota(jnp.int32, (1, 1, n2), 2)
    onehot = col == idx                                   # (BB, TR, N2)
    p_sel = jnp.sum(jnp.where(onehot, pred, jnp.zeros((), pred.dtype)),
                    axis=-1, keepdims=True).astype(jnp.float32)   # (BB, TR, 1)

    # NOTE: this MUST stay a select (not multiply-by-mask): for padded rows and
    # for out-of-bounds boundary-block garbage the unselected branch is
    # inf/NaN and must never reach the sum.
    contrib = jnp.where(idx >= 0, -jnp.log(p_sel), jnp.float32(0.0))

    out_ref[...] = jnp.sum(contrib, keepdims=True)[None]  # (1, 1, 1, 1)


def cross_entropy_loss(pred_dsmat, gt_perm, src_ns, tgt_ns):
    """Pallas equivalent of CrossEntropyLoss.forward. Returns a scalar f32."""
    b, n1, n2 = pred_dsmat.shape
    src_ns = src_ns.astype(jnp.int32)
    tgt_ns = tgt_ns.astype(jnp.int32)
    # TODO(synk): torch's host-side 0<=S<=1 / 0<=X<=1 asserts are debug-only
    # checks and are not reproduced here.

    # First-occurrence argmax over the first tgt_ns[b] columns (matches
    # torch.max(...).indices on the sliced gt; gt values live in [0,1] so -1
    # never wins when tgt_ns[b] >= 1).  Rows beyond src_ns[b] get sentinel -1,
    # so the kernel needs no scalar-prefetched src_ns at all.
    col = jnp.arange(n2, dtype=jnp.int32)[None, None, :]
    masked_gt = jnp.where(col < tgt_ns[:, None, None],
                          gt_perm.astype(jnp.float32), jnp.float32(-1.0))
    gt_idx = jnp.argmax(masked_gt, axis=-1).astype(jnp.int32)        # (B, N1)
    row = jnp.arange(n1, dtype=jnp.int32)[None, :]
    gt_idx = jnp.where(row < src_ns[:, None], gt_idx, jnp.int32(-1))
    gt_idx = gt_idx[..., None]                                       # (B, N1, 1)

    # ---- tile selection with *padded* VMEM footprints ---------------------
    itemsize = jnp.dtype(pred_dsmat.dtype).itemsize
    sub = 8 * max(1, 4 // itemsize)          # packed sublane multiple: 8/16/32
    lane_n2 = ((n2 + 127) // 128) * 128      # lane-padded pred block width
    PRED_BUDGET = 4 * 1024 * 1024            # per buffer; double-buffered total
                                             # fits v5e's 16 MiB scoped VMEM

    def _rup(x, m):
        return ((x + m - 1) // m) * m

    def pred_block_bytes(bb_, tr_):
        return bb_ * _rup(tr_, sub) * lane_n2 * itemsize

    def idx_block_bytes(bb_, tr_):
        # A last-dim-1 int32 VMEM block is lane-padded to 128 lanes.
        return bb_ * _rup(tr_, 8) * 128 * 4

    def best_tr(bb_):
        if pred_block_bytes(bb_, n1) <= PRED_BUDGET:
            return n1                        # full row extent in one block
        max_rows = PRED_BUDGET // max(1, bb_ * lane_n2 * itemsize)
        return max(sub, (max_rows // sub) * sub)

    bb = min(b, 8)
    tr = best_tr(bb)
    while bb > 1 and pred_block_bytes(bb, tr) > PRED_BUDGET:
        bb = max(1, bb // 2)
        tr = best_tr(bb)                     # recompute after shrinking bb

    # Both grid axes are parallel; make sure v7x's second TensorCore gets work
    # when the grid would otherwise collapse to a single point.
    if b >= 2 and bb > 1 and pl.cdiv(b, bb) * pl.cdiv(n1, tr) < 2:
        bb = (bb + 1) // 2

    nb = pl.cdiv(b, bb)
    nr = pl.cdiv(n1, tr)

    # Only the tiny index tensor is padded; the -1 sentinel masks the padded
    # rows AND whatever HBM garbage the boundary pred blocks pick up.  The full
    # (B, N1, N2) prediction tensor is never copied.
    b_pad = nb * bb - b
    r_pad = nr * tr - n1
    if b_pad or r_pad:
        gt_idx = jnp.pad(gt_idx, ((0, b_pad), (0, r_pad), (0, 0)),
                         constant_values=-1)

    vmem_limit = int(min(
        max(4 * (pred_block_bytes(bb, tr) + idx_block_bytes(bb, tr)),
            16 * 1024 * 1024),
        60 * 1024 * 1024))

    cost = pl.CostEstimate(
        flops=3 * b * n1 * n2,
        transcendentals=b * n1,
        bytes_accessed=b * n1 * n2 * itemsize + b * n1 * 4 + nb * nr * 4)

    # TODO(synk): for production shapes with n2 << 128 every vreg row carries
    # only n2/128 useful lanes; a fused plain-XLA expression may beat tiling.
    partials = pl.pallas_call(
        ce_kernel,
        out_shape=jax.ShapeDtypeStruct((nb, nr, 1, 1), jnp.float32),
        grid_spec=pltpu.PrefetchScalarGridSpec(
            num_scalar_prefetch=0,
            grid=(nb, nr),
            in_specs=[
                pl.BlockSpec((bb, tr, n2), lambda i, j: (i, j, 0)),
                pl.BlockSpec((bb, tr, 1), lambda i, j: (i, j, 0)),
            ],
            out_specs=pl.BlockSpec((1, 1, 1, 1), lambda i, j: (i, j, 0, 0)),
        ),
        compiler_params=pltpu.CompilerParams(
            dimension_semantics=("parallel", "parallel"),
            vmem_limit_bytes=vmem_limit),
        cost_estimate=cost,
    )(pred_dsmat, gt_idx)

    # Final reduction over a handful of scalars + division (matches the
    # reference, including NaN if sum(src_ns) == 0 — no extra guard).
    return jnp.sum(partials) / jnp.sum(src_ns.astype(jnp.float32))


def _reference_loss(pred, gt, src_ns, tgt_ns):
    """Pure-NumPy reference mirroring the PyTorch loop."""
    pred = np.asarray(pred, dtype=np.float32)
    gt = np.asarray(gt, dtype=np.float32)
    total, nsum = 0.0, 0.0
    for i in range(pred.shape[0]):
        s, t = int(src_ns[i]), int(tgt_ns[i])
        p = pred[i, :s, :t]
        g = gt[i, :s, :t]
        idx = np.argmax(g, axis=-1)
        total += -np.sum(np.log(p[np.arange(s), idx]))
        nsum += s
    return np.float32(total / nsum)


if __name__ == "__main__":
    key = jax.random.PRNGKey(0)

    # --- case 1: square, tile-aligned shapes -------------------------------
    B, N1, N2 = 2, 8, 8
    k_pred, k_perm0, k_perm1, k_pred2, k_idx2 = jax.random.split(key, 5)
    pred_dsmat = jax.nn.softmax(
        jax.random.normal(k_pred, (B, N1, N2), dtype=jnp.float32), axis=-1)
    perms = jnp.stack([
        jax.random.permutation(k_perm0, N2),
        jax.random.permutation(k_perm1, N2),
    ])                                                    # (B, N1) since N1 == N2
    gt_perm = jax.nn.one_hot(perms, N2, dtype=jnp.float32)
    src_ns = jnp.array([6, 8], dtype=jnp.int32)
    tgt_ns = jnp.array([7, 8], dtype=jnp.int32)

    loss = jax.block_until_ready(
        cross_entropy_loss(pred_dsmat, gt_perm, src_ns, tgt_ns))
    ref = _reference_loss(pred_dsmat, gt_perm, np.asarray(src_ns),
                          np.asarray(tgt_ns))
    assert np.allclose(np.asarray(loss), ref, rtol=1e-5, atol=1e-5), (loss, ref)

    # --- case 2: non-tile-multiple batch/rows (exercises the no-pad path) ---
    B2, M1, M2 = 3, 10, 8
    pred2 = jax.nn.softmax(
        jax.random.normal(k_pred2, (B2, M1, M2), dtype=jnp.float32), axis=-1)
    gt_idx2 = jax.random.randint(k_idx2, (B2, M1), 0, M2)
    gt2 = jax.nn.one_hot(gt_idx2, M2, dtype=jnp.float32)
    src_ns2 = jnp.array([10, 7, 9], dtype=jnp.int32)
    tgt_ns2 = jnp.array([8, 6, 8], dtype=jnp.int32)

    loss2 = jax.block_until_ready(
        cross_entropy_loss(pred2, gt2, src_ns2, tgt_ns2))
    ref2 = _reference_loss(pred2, gt2, np.asarray(src_ns2), np.asarray(tgt_ns2))
    assert np.allclose(np.asarray(loss2), ref2, rtol=1e-5, atol=1e-5), (loss2, ref2)

    print("KERNEL_OK")
</pallas_src>

<mosaic_0001>
module attributes {stable_mosaic.version = 11 : i64} {
  func.func @ce_kernel(%arg0: i32, %arg1: i32, %arg2: memref<1x8x8xf32, #tpu.memory_space<vmem>>, %arg3: memref<1x8x1xi32, #tpu.memory_space<vmem>>, %arg4: memref<1x1x1x1xf32, #tpu.memory_space<vmem>>) attributes {dimension_semantics = [#tpu.dimension_semantics<parallel>, #tpu.dimension_semantics<parallel>], iteration_bounds = array<i64: 2, 1>, scalar_prefetch = 0 : i64, scratch_operands = 0 : i64, tpu.core_type = #tpu.core_type<tc>, window_params = [{transform_indices = @transform_0, window_bounds = array<i64: 1, 8, 8>}, {transform_indices = @transform_1, window_bounds = array<i64: 1, 8, 1>}, {transform_indices = @transform_2, window_bounds = array<i64: 1, 1, 1, 1>}]} {
    %c0 = arith.constant 0 : index
    %c0_0 = arith.constant 0 : index
    %c0_1 = arith.constant 0 : index
    %0 = vector.load %arg3[%c0, %c0_0, %c0_1] : memref<1x8x1xi32, #tpu.memory_space<vmem>>, vector<1x8x1xi32>
    %c0_2 = arith.constant 0 : index
    %c0_3 = arith.constant 0 : index
    %c0_4 = arith.constant 0 : index
    %1 = vector.load %arg2[%c0_2, %c0_3, %c0_4] : memref<1x8x8xf32, #tpu.memory_space<vmem>>, vector<1x8x8xf32>
    %2 = tpu.iota {dimensions = array<i32: 2>} : vector<1x1x8xi32>
    %3 = vector.broadcast %2 : vector<1x1x8xi32> to vector<1x8x8xi32>
    %4 = vector.broadcast %0 : vector<1x8x1xi32> to vector<1x8x8xi32>
    %5 = arith.cmpi eq, %3, %4 : vector<1x8x8xi32>
    %cst = arith.constant 0.000000e+00 : f32
    %6 = vector.broadcast %cst : f32 to vector<1x8x8xf32>
    %7 = arith.select %5, %1, %6 : vector<1x8x8xi1>, vector<1x8x8xf32>
    %cst_5 = arith.constant dense<0.000000e+00> : vector<1x8xf32>
    %8 = vector.multi_reduction <add>, %7, %cst_5 [2] : vector<1x8x8xf32> to vector<1x8xf32>
    %9 = vector.shape_cast %8 : vector<1x8xf32> to vector<1x8x1xf32>
    %c0_i32 = arith.constant 0 : i32
    %10 = vector.broadcast %c0_i32 : i32 to vector<1x8x1xi32>
    %11 = arith.cmpi sge, %0, %10 : vector<1x8x1xi32>
    %12 = math.log %9 : vector<1x8x1xf32>
    %cst_6 = arith.constant 0.000000e+00 : f32
    %13 = vector.broadcast %cst_6 : f32 to vector<1x8x1xf32>
    %14 = arith.subf %13, %12 : vector<1x8x1xf32>
    %cst_7 = arith.constant 0.000000e+00 : f32
    %15 = vector.broadcast %cst_7 : f32 to vector<1x8x1xf32>
    %16 = arith.select %11, %14, %15 : vector<1x8x1xi1>, vector<1x8x1xf32>
    %17 = vector.shape_cast %16 : vector<1x8x1xf32> to vector<1x1x8x1xf32>
    %cst_8 = arith.constant dense<0.000000e+00> : vector<1xf32>
    %18 = vector.multi_reduction <add>, %17, %cst_8 [1, 2, 3] : vector<1x1x8x1xf32> to vector<1xf32>
    %19 = vector.shape_cast %18 : vector<1xf32> to vector<1x1x1x1xf32>
    %20 = vector.extract %19[0, 0, 0, 0] : f32 from vector<1x1x1x1xf32>
    %21 = vector.broadcast %20 : f32 to vector<1x1x1xf32>
    %22 = vector.shape_cast %21 : vector<1x1x1xf32> to vector<1x1x1x1xf32>
    %c0_9 = arith.constant 0 : index
    %c0_10 = arith.constant 0 : index
    %c0_11 = arith.constant 0 : index
    %c0_12 = arith.constant 0 : index
    %23 = vector.load %arg4[%c0_9, %c0_10, %c0_11, %c0_12] : memref<1x1x1x1xf32, #tpu.memory_space<vmem>>, vector<1x1x1x1xf32>
    tpu.vector_store %arg4[%c0_9, %c0_10, %c0_11, %c0_12], %22 {strides = array<i32>} : memref<1x1x1x1xf32, #tpu.memory_space<vmem>>, vector<1x1x1x1xf32>,
    return
  }
  func.func @transform_0(%arg0: i32, %arg1: i32) -> (i32, i32, i32) {
    %c0_i32 = arith.constant 0 : i32
    %c0_i32_0 = arith.constant 0 : i32
    return %arg0, %arg1, %c0_i32 : i32, i32, i32
  }
  func.func @transform_1(%arg0: i32, %arg1: i32) -> (i32, i32, i32) {
    %c0_i32 = arith.constant 0 : i32
    %c0_i32_0 = arith.constant 0 : i32
    return %arg0, %arg1, %c0_i32 : i32, i32, i32
  }
  func.func @transform_2(%arg0: i32, %arg1: i32) -> (i32, i32, i32, i32) {
    %c0_i32 = arith.constant 0 : i32
    %c0_i32_0 = arith.constant 0 : i32
    %c0_i32_1 = arith.constant 0 : i32
    return %arg0, %arg1, %c0_i32, %c0_i32_0 : i32, i32, i32, i32
  }
}

</mosaic_0001>

<llo_original>
// kernel: tpu_custom_call.1
$region0: #{tpu_custom_call.1}
  #allocation0 [shape = 'u32[]', space=smem, size = 0x4, offset = 0x4, fixed_abs, tag = 'smem constant byte address 0x4 - core index']
  #allocation1 [shape = 'u32[72,128]{1,0:T(1,128)}', space=vmem, size = 0x9000, scoped, tag = 'internal scratch']
  %s0 = inlined_call_operand.vmem [shape: f32[2,8,8], index: 0, kind: input, shape index: {}]
  %s1 = inlined_call_operand.vmem [shape: s32[2,8,1], index: 1, kind: input, shape index: {}]
  %s2 = inlined_call_operand.vmem [shape: f32[2,1,1,1], index: 2, kind: output, shape index: {}]
  %s3 = sld [smem:[#allocation0]]
  $region41: #{tpu_custom_call.1} parent=0
    _
  %s5 = ssub.s32 1, %s3
  %s6 = scalar_select 0, %s5, %s3
  loop: start=0, step=1, limit=4
  $region2: #{tpu_custom_call.1} parent=0 // loop_pre_header
    _
  $region3: #{tpu_custom_call.1} parent=0 // loop_header
    %s8 = sphi 0, %s12
    %p9 = scmp.ge.s32.totalorder %s8, 4
    %s15 = sphi 0, %s27
    %s16 = sphi 0, %s23
    %s17 = sphi 0, %s15
    %s18 = sphi 0, %s16
    %s19 = sphi 0, %s17
    %s20 = sphi 0, %s18
    %s32 = sphi 0, %s34
    %s35 = sphi 0, %s32
    %s36 = sphi 0, %s35
    %s52 = sphi 0, %s36
    %s60 = sphi 0, %s62
    %s63 = sphi 0, %s60
    %s64 = sphi 0, %s63
    %s80 = sphi 0, %s64
    %s88 = sphi 0, %s90
    %s91 = sphi 0, %s88
    %s92 = sphi 0, %s91
    %s108 = sphi 0, %s92
  $region4: #{tpu_custom_call.1} parent=0 // loop_header_branch
    %11 = sbr.rel (%p9) target = $region8
  $region5: #{tpu_custom_call.1} parent=0 // loop_body
    %s13 = ssub.s32 %s8, 1
    %s14 = ssub.s32 %s8, 2
    %s21 = sadd.s32 1, %s16
    %p22 = scmp.ge.s32.totalorder %s21, 1
    %s23 = scalar_select %p22, 0, %s21
    %s24 = sadd.s32 1, %s15
    %s25 = scalar_select %p22, %s24, %s15
    %p26 = scmp.ge.s32.totalorder %s25, 2
    %s27 = scalar_select %p26, 0, %s25
    %s28 = ssub.s32 %s15, %s27
    %s29 = ssub.s32 %s16, %s23
    %s30 = sor.u32 %s28, %s29
    %p31 = scmp.eq.s32.totalorder %s30, 0
    %s33 = sadd.s32 %s32, 1
    %s34 = scalar_select %p31, %s32, %s33
    %p37 = pneg %p31
    %p38 = scmp.eq.s32.totalorder %s8, 1
    %p39 = por %p37, %p38
    %p40 = scmp.ne.s32.totalorder %s32, %s35
    %p41 = scmp.eq.s32.totalorder %s8, 0
    %p42 = por %p40, %p41
    %p43 = scmp.ne.s32.totalorder %s32, %s35
    %p44 = scmp.eq.s32.totalorder %s13, 1
    %p45 = por %p43, %p44
    %p46 = scmp.ne.s32.totalorder %s35, %s36
    %p47 = scmp.eq.s32.totalorder %s13, 0
    %p48 = por %p46, %p47
    %p49 = scmp.ne.s32.totalorder %s35, %s36
    %p50 = scmp.eq.s32.totalorder %s14, 1
    %p51 = por %p49, %p50
    %p53 = scmp.ne.s32.totalorder %s36, %s52
    %p54 = scmp.eq.s32.totalorder %s14, 0
    %p55 = por %p53, %p54
    %s56 = ssub.s32 %s15, %s27
    %s57 = ssub.s32 %s16, %s23
    %s58 = sor.u32 %s56, %s57
    %p59 = scmp.eq.s32.totalorder %s58, 0
    %s61 = sadd.s32 %s60, 1
    %s62 = scalar_select %p59, %s60, %s61
    %p65 = pneg %p59
    %p66 = scmp.eq.s32.totalorder %s8, 1
    %p67 = por %p65, %p66
    %p68 = scmp.ne.s32.totalorder %s60, %s63
    %p69 = scmp.eq.s32.totalorder %s8, 0
    %p70 = por %p68, %p69
    %p71 = scmp.ne.s32.totalorder %s60, %s63
    %p72 = scmp.eq.s32.totalorder %s13, 1
    %p73 = por %p71, %p72
    %p74 = scmp.ne.s32.totalorder %s63, %s64
    %p75 = scmp.eq.s32.totalorder %s13, 0
    %p76 = por %p74, %p75
    %p77 = scmp.ne.s32.totalorder %s63, %s64
    %p78 = scmp.eq.s32.totalorder %s14, 1
    %p79 = por %p77, %p78
    %p81 = scmp.ne.s32.totalorder %s64, %s80
    %p82 = scmp.eq.s32.totalorder %s14, 0
    %p83 = por %p81, %p82
    %s84 = ssub.s32 %s15, %s27
    %s85 = ssub.s32 %s16, %s23
    %s86 = sor.u32 %s84, %s85
    %p87 = scmp.eq.s32.totalorder %s86, 0
    %s89 = sadd.s32 %s88, 1
    %s90 = scalar_select %p87, %s88, %s89
    %p93 = pneg %p87
    %p94 = scmp.eq.s32.totalorder %s8, 1
    %p95 = por %p93, %p94
    %p96 = scmp.ne.s32.totalorder %s88, %s91
    %p97 = scmp.eq.s32.totalorder %s8, 0
    %p98 = por %p96, %p97
    %p99 = scmp.ne.s32.totalorder %s88, %s91
    %p100 = scmp.eq.s32.totalorder %s13, 1
    %p101 = por %p99, %p100
    %p102 = scmp.ne.s32.totalorder %s91, %s92
    %p103 = scmp.eq.s32.totalorder %s13, 0
    %p104 = por %p102, %p103
    %p105 = scmp.ne.s32.totalorder %s91, %s92
    %p106 = scmp.eq.s32.totalorder %s14, 1
    %p107 = por %p105, %p106
    %p109 = scmp.ne.s32.totalorder %s92, %s108
    %p110 = scmp.eq.s32.totalorder %s14, 0
    %p111 = por %p109, %p110
    %p112 = scmp.le.s32.totalorder 1, %s8
    %p113 = scmp.lt.s32.totalorder %s8, 3
    %p114 = pnand %p112, %p113
    %p115 = pneg %p114
    // Predicated region
    $region9: #{tpu_custom_call.1} parent=5 // pred_check
      _
    $region10: #{tpu_custom_call.1} parent=5 // pred_check_branch
      %117 = sbr.rel (%p114) target = $region12
    $region11: #{tpu_custom_call.1} parent=5 // pred_region
      %s118 = ssub.s32 %s8, 1
    $region12: #{tpu_custom_call.1} parent=5 // pred_fallthru
      _
    %p119 = scmp.lt.s32.totalorder %s8, 2
    // Predicated region
    $region13: #{tpu_custom_call.1} parent=5 // pred_check
      %p120 = pneg %p119
    $region14: #{tpu_custom_call.1} parent=5 // pred_check_branch
      %122 = sbr.rel (%p120) target = $region16
    $region15: #{tpu_custom_call.1} parent=5 // pred_region
      // Predicated region
      $region17: #{tpu_custom_call.1} parent=15 // pred_check
        %p123 = pneg %p42
      $region18: #{tpu_custom_call.1} parent=15 // pred_check_branch
        %125 = sbr.rel (%p123) target = $region20
      $region19: #{tpu_custom_call.1} parent=15 // pred_region
        %p126 = scmp.lt.s32.totalorder %s15, 1
        %s127 = scalar_select %p126, %s15, 1
        %p128 = scmp.lt.s32.totalorder %s16, 0
        %s129 = scalar_select %p128, %s16, 0
        %s130 = sadd.s32 %s129, %s127
        %s131 = smul.addr %s130, 8
        %s132 = scalar_lea.vmem %s0, %s131
      $region20: #{tpu_custom_call.1} parent=15 // pred_fallthru
        _
      // Predicated region
      $region21: #{tpu_custom_call.1} parent=15 // pred_check
        %p133 = pneg %p70
      $region22: #{tpu_custom_call.1} parent=15 // pred_check_branch
        %135 = sbr.rel (%p133) target = $region24
      $region23: #{tpu_custom_call.1} parent=15 // pred_region
        %p136 = scmp.lt.s32.totalorder %s15, 1
        %s137 = scalar_select %p136, %s15, 1
        %p138 = scmp.lt.s32.totalorder %s16, 0
        %s139 = scalar_select %p138, %s16, 0
        %s140 = sadd.s32 %s139, %s137
        %s141 = smul.addr %s140, 8
        %s142 = scalar_lea.vmem %s1, %s141
      $region24: #{tpu_custom_call.1} parent=15 // pred_fallthru
        _
    $region16: #{tpu_custom_call.1} parent=5 // pred_fallthru
      _
    %p143 = scmp.le.s32.totalorder 1, %s8
    %p144 = scmp.lt.s32.totalorder %s8, 3
    %p145 = pnand %p143, %p144
    %p146 = pneg %p145
    // Predicated region
    $region25: #{tpu_custom_call.1} parent=5 // pred_check
      _
    $region26: #{tpu_custom_call.1} parent=5 // pred_check_branch
      %148 = sbr.rel (%p145) target = $region28
    $region27: #{tpu_custom_call.1} parent=5 // pred_region
      %s149 = ssub.s32 %s8, 1
      %p150 = scmp.lt.s32.totalorder %s17, 1
      %s151 = scalar_select %p150, %s17, 1
      %p152 = scmp.lt.s32.totalorder %s18, 0
      %s153 = scalar_select %p152, %s18, 0
      %s154 = sadd.s32 %s153, %s151
      %s155 = smul.addr %s154, 8
      %s156 = scalar_lea.vmem %s0, %s155
      %p157 = pneg %p48
      %p158 = pneg %p45
      %p159 = scmp.lt.s32.totalorder %s17, 1
      %s160 = scalar_select %p159, %s17, 1
      %p161 = scmp.lt.s32.totalorder %s18, 0
      %s162 = scalar_select %p161, %s18, 0
      %s163 = sadd.s32 %s162, %s160
      %s164 = smul.addr %s163, 8
      %s165 = scalar_lea.vmem %s1, %s164
      %p166 = pneg %p76
      %p167 = pneg %p73
      %p168 = pneg %p104
      %p169 = pneg %p101
      %p170 = scmp.lt.s32.totalorder %s17, 1
      %s171 = scalar_select %p170, %s17, 1
      %p172 = scmp.lt.s32.totalorder %s18, 0
      %s173 = scalar_select %p172, %s18, 0
      %s174 = sadd.s32 %s173, %s171
      %s175 = scalar_lea.vmem %s2, %s174
      %p176 = scmp.lt.s32.totalorder %s17, 1
      %s177 = scalar_select %p176, %s17, 1
      %p178 = scmp.lt.s32.totalorder %s18, 0
      %s179 = scalar_select %p178, %s18, 0
      %s180 = sadd.s32 %s179, %s177
      %s181 = smul.addr %s180, 8
      %s182 = scalar_lea.vmem %s0, %s181
      %p183 = scmp.lt.s32.totalorder %s17, 1
      %s184 = scalar_select %p183, %s17, 1
      %p185 = scmp.lt.s32.totalorder %s18, 0
      %s186 = scalar_select %p185, %s18, 0
      %s187 = sadd.s32 %s186, %s184
      %s188 = smul.addr %s187, 8
      %s189 = scalar_lea.vmem %s1, %s188
      %p190 = scmp.lt.s32.totalorder %s17, 1
      %s191 = scalar_select %p190, %s17, 1
      %p192 = scmp.lt.s32.totalorder %s18, 0
      %s193 = scalar_select %p192, %s18, 0
      %s194 = sadd.s32 %s193, %s191
      %s195 = scalar_lea.vmem %s2, %s194
      %v196 = vld [vmem:[%s189] sm:$0xff]
      %v197 = vld [vmem:[%s182] sm:$0xff]
      %v198 = vlaneseq
      %v199 = vand.u32 %v198, 127
      %200 = vset.pattern.permute.xlu0 0
      %201 = vperm.xlu0 %200, %v196
      %v202 = vpop.permute.xlu0 %201
      %vm203 = vcmp.eq.s32.totalorder %v199, %v202
      %v204 = vsel %vm203, %v197, 0.0
      %vm205 = vcmask 64512
      %v206 = vsel %vm205, %v204, 0.0
      %207 = vadd.xlane.f32.xlu0 %v206
      %v208 = vpop.xlane.xlu0 %207
      %vm209 = vcmp.ge.s32.totalorder %v196, 0
      %v210 = vlog2.pop %v208
      %v211 = vmul.f32 %v210, 0.6931472
      %v212 = vsub.f32 0.0, %v211
      %v213 = vsel %vm209, %v212, 0.0
      %vm214 = vcmask 7168
      %v215 = vsel %vm214, %v213, 0.0
      %216 = vadd.xlane.f32.xlu0 %v215
      %v217 = vpop.xlane.xlu0 %216
      %v218 = vrot.slane %v217, 4
      %v219 = vadd.f32 %v217, %v218
      %v220 = vrot.slane %v219, 2
      %v221 = vadd.f32 %v219, %v220
      %v222 = vrot.slane %v221, 1
      %v223 = vadd.f32 %v221, %v222
      %s224 = vtos %v223
      %v225 = vstv %s224
      %vm226 = vcmask 0
      %227 = vst.msk [vmem:[%s195] sm:$0x1] %vm226, %v225
      %p228 = scmp.lt.s32.totalorder %s17, 1
      %s229 = scalar_select %p228, %s17, 1
      %p230 = scmp.lt.s32.totalorder %s18, 0
      %s231 = scalar_select %p230, %s18, 0
      %s232 = sadd.s32 %s231, %s229
      %s233 = scalar_lea.vmem %s2, %s232
      // Predicated region
      $region29: #{tpu_custom_call.1} parent=27 // pred_check
        %p234 = pneg %p101
      $region30: #{tpu_custom_call.1} parent=27 // pred_check_branch
        %236 = sbr.rel (%p234) target = $region32
      $region31: #{tpu_custom_call.1} parent=27 // pred_region
        _
      $region32: #{tpu_custom_call.1} parent=27 // pred_fallthru
        _
    $region28: #{tpu_custom_call.1} parent=5 // pred_fallthru
      _
    %p237 = scmp.le.s32.totalorder 2, %s8
    // Predicated region
    $region33: #{tpu_custom_call.1} parent=5 // pred_check
      %p238 = pneg %p237
    $region34: #{tpu_custom_call.1} parent=5 // pred_check_branch
      %240 = sbr.rel (%p238) target = $region36
    $region35: #{tpu_custom_call.1} parent=5 // pred_region
      %s241 = ssub.s32 %s8, 2
      // Predicated region
      $region37: #{tpu_custom_call.1} parent=35 // pred_check
        %p242 = pneg %p107
      $region38: #{tpu_custom_call.1} parent=35 // pred_check_branch
        %244 = sbr.rel (%p242) target = $region40
      $region39: #{tpu_custom_call.1} parent=35 // pred_region
        %p245 = scmp.lt.s32.totalorder %s19, 1
        %s246 = scalar_select %p245, %s19, 1
        %p247 = scmp.lt.s32.totalorder %s20, 0
        %s248 = scalar_select %p247, %s20, 0
        %s249 = sadd.s32 %s248, %s246
        %s250 = scalar_lea.vmem %s2, %s249
      $region40: #{tpu_custom_call.1} parent=35 // pred_fallthru
        _
    $region36: #{tpu_custom_call.1} parent=5 // pred_fallthru
      _
  $region6: #{tpu_custom_call.1} parent=0 // loop_footer
    %s12 = sadd.s32 1, %s8
  $region7: #{tpu_custom_call.1} parent=0 // loop_footer_branch
    %7 = sbr.rel target = $region3
  $region8: #{tpu_custom_call.1} parent=0 // loop_exit
    _

</llo_original>
